<compile_context>
chip_gen: v6e
topology: v6e:2x2x1
jax: 0.10.0
libtpu: 0.0.40
codegen_flags: <defaults>
</compile_context>

<pallas_src>
import jax
import jax.numpy as jnp
import numpy as np
from jax.experimental import pallas as pl
from jax.experimental.pallas import tpu as pltpu


# -----------------------------------------------------------------------------
# Generator kernel (lane-dense): guided residual 1x1-conv MLP over pixels.
#   h1 = relu(W1a @ Xlr + W1b @ Xt1 + b1)   (HID, P)
#   h2 = relu(W2  @ h1  + b2)               (HID, P)
#   y  =      W3  @ h2  + b3 + Xlr          (2,   P)   residual on (real, imag) LR input
# -----------------------------------------------------------------------------
def gen_kernel(xlr_ref, xt1_ref, w1a_ref, w1b_ref, b1_ref, w2_ref, b2_ref,
               w3_ref, b3_ref, o_ref):
    dot = lambda a, b: jnp.dot(a, b, preferred_element_type=jnp.float32)
    xlr = xlr_ref[0]                       # (2, P)
    xt1 = xt1_ref[0]                       # (2, P)
    h = dot(w1a_ref[...], xlr) + dot(w1b_ref[...], xt1) + b1_ref[...]
    h = jnp.maximum(h, 0.0)
    h = dot(w2_ref[...], h) + b2_ref[...]
    h = jnp.maximum(h, 0.0)
    y = dot(w3_ref[...], h) + b3_ref[...]
    o_ref[0] = y + xlr


def run_generator(x_lr, x_t1, params):
    N, C, H, W = x_lr.shape                # C == 2 (real, imag)
    P = H * W
    w1, b1, w2, b2, w3, b3 = params        # logical orientation: x_row @ w (see generator_ref)

    # One-time transposes so pixels sit on the lane axis inside the kernel.
    w1a = jnp.transpose(w1[:C])            # (HID, 2)  weights for x_lr channels
    w1b = jnp.transpose(w1[C:])            # (HID, 2)  weights for x_t1 channels
    b1t = jnp.transpose(b1)                # (HID, 1)
    w2t = jnp.transpose(w2)                # (HID, HID)
    b2t = jnp.transpose(b2)                # (HID, 1)
    w3t = jnp.transpose(w3)                # (2, HID)
    b3t = jnp.transpose(b3)                # (2, 1)

    # Free reshapes (trailing-dim merge of contiguous NCHW data).
    xlr_f = x_lr.reshape(N, C, P)
    xt1_f = x_t1.reshape(N, C, P)

    # NOTE: full H*W per grid step; for large images tile P in multiples of 128.
    full = lambda a: pl.BlockSpec(a.shape, lambda b: (0,) * a.ndim)
    out = pl.pallas_call(
        gen_kernel,
        out_shape=jax.ShapeDtypeStruct((N, C, P), jnp.float32),
        grid=(N,),
        in_specs=[
            pl.BlockSpec((1, C, P), lambda b: (b, 0, 0)),
            pl.BlockSpec((1, C, P), lambda b: (b, 0, 0)),
            full(w1a), full(w1b), full(b1t), full(w2t), full(b2t),
            full(w3t), full(b3t),
        ],
        out_specs=pl.BlockSpec((1, C, P), lambda b: (b, 0, 0)),
        compiler_params=pltpu.CompilerParams(dimension_semantics=("parallel",)),
    )(xlr_f, xt1_f, w1a, w1b, b1t, w2t, b2t, w3t, b3t)
    return out.reshape(N, C, H, W)         # free reshape back to NCHW


# -----------------------------------------------------------------------------
# Data-consistency kernel (per batch element, fused fft2 -> DC -> ifft2):
#   K    = Fh @ X @ Fw                      (fft2, ortho, 3-mult complex matmuls)
#   Kdc  = K + m * (K0 - K)                 (noise_lvl = None, single mask plane)
#   Kout = Kdc                              (== fft2_net(ifft2(Kdc)) for ortho DFT)
#   Xdc  = conj(Fh) @ Kdc @ conj(Fw)        (ifft2; conjugation folded into the algebra)
# Each complex matrix product uses Gauss's 3-multiplication trick; the constant
# operand's (real+imag) / (real-imag) combinations are precomputed host-side
# (fhs/fhd/fws/fwd), so each complex product costs 3 MXU matmuls + a few VPU adds.
# -----------------------------------------------------------------------------
def dc_kernel(p_ref, k0_ref, m_ref,
              fhr_ref, fhi_ref, fhs_ref, fhd_ref,
              fwr_ref, fwi_ref, fws_ref, fwd_ref,
              od_ref, ok_ref):
    dot = lambda a, b: jnp.dot(a, b, preferred_element_type=jnp.float32)
    xr, xi = p_ref[0, 0], p_ref[0, 1]
    k0r, k0i = k0_ref[0, 0], k0_ref[0, 1]
    m = m_ref[0, 0]
    fhr, fhi = fhr_ref[...], fhi_ref[...]
    fhs, fhd = fhs_ref[...], fhd_ref[...]
    fwr, fwi = fwr_ref[...], fwi_ref[...]
    fws, fwd = fws_ref[...], fwd_ref[...]

    # fft2(pred): T = Fh @ X ; K = T @ Fw     (Fh = fhr + i fhi, Fw = fwr + i fwi)
    p1 = dot(fhr, xr)
    p2 = dot(fhi, xi)
    p3 = dot(fhs, xr + xi)                 # fhs = fhr + fhi
    tr = p1 - p2
    ti = p3 - p1 - p2
    q1 = dot(tr, fwr)
    q2 = dot(ti, fwi)
    q3 = dot(tr + ti, fws)                 # fws = fwr + fwi
    kr = q1 - q2
    ki = q3 - q1 - q2

    # hard data consistency:  Kdc = (1-m)*K + m*K0  ==  K + m*(K0 - K)
    kdr = kr + m * (k0r - kr)
    kdi = ki + m * (k0i - ki)

    # k-space of the DC'd image (fft2_net): identical to Kdc for the ortho DFT.
    ok_ref[0, 0] = kdr
    ok_ref[0, 1] = kdi

    # ifft2: Z = conj(Fh) @ Kdc ; Xdc = Z @ conj(Fw)
    r1 = dot(fhr, kdr)
    r2 = dot(fhi, kdi)
    r3 = dot(fhd, kdr + kdi)               # fhd = fhr - fhi
    zr = r1 + r2
    zi = r3 - r1 + r2
    s1 = dot(zr, fwr)
    s2 = dot(zi, fwi)
    s3 = dot(zr + zi, fwd)                 # fwd = fwr - fwi
    od_ref[0, 0] = s1 + s2
    od_ref[0, 1] = s3 - s1 + s2


def make_dft_mats(h, w):
    """Orthonormal DFT matrices and their (real+imag)/(real-imag) combinations."""
    def mats(n):
        k = np.arange(n)
        ang = -2.0 * np.pi * np.outer(k, k) / n
        s = 1.0 / np.sqrt(n)
        fr = np.cos(ang) * s
        fi = np.sin(ang) * s
        return (jnp.asarray(fr, jnp.float32), jnp.asarray(fi, jnp.float32),
                jnp.asarray(fr + fi, jnp.float32), jnp.asarray(fr - fi, jnp.float32))
    return mats(h) + mats(w)   # (fhr, fhi, fhs, fhd, fwr, fwi, fws, fwd)


def run_dc(pred, k0, mask, dft):
    N, C, H, W = pred.shape
    fhr, fhi, fhs, fhd, fwr, fwi, fws, fwd = dft
    plane2 = pl.BlockSpec((1, C, H, W), lambda b: (b, 0, 0, 0))
    mask1 = pl.BlockSpec((1, 1, H, W), lambda b: (b, 0, 0, 0))   # channel 0 only
    mat = lambda a: pl.BlockSpec(a.shape, lambda b: (0, 0))

    img_dc, kspc = pl.pallas_call(
        dc_kernel,
        out_shape=(jax.ShapeDtypeStruct((N, C, H, W), jnp.float32),
                   jax.ShapeDtypeStruct((N, C, H, W), jnp.float32)),
        grid=(N,),
        in_specs=[plane2, plane2, mask1,
                  mat(fhr), mat(fhi), mat(fhs), mat(fhd),
                  mat(fwr), mat(fwi), mat(fws), mat(fwd)],
        out_specs=(plane2, plane2),
        compiler_params=pltpu.CompilerParams(dimension_semantics=("parallel",)),
    )(pred, k0, mask, fhr, fhi, fhs, fhd, fwr, fwi, fws, fwd)
    return img_dc, kspc


# -----------------------------------------------------------------------------
# RecurrentModel.forward
# -----------------------------------------------------------------------------
def recurrent_forward(tag_image_sub, ref_image_full, tag_kspace_full,
                      tag_kspace_mask2d, params, dft, n_recurrent):
    assert n_recurrent >= 1
    # In the original forward(), the recurrence inputs I (= tag_image_sub) and T1
    # (= ref_image_full) are never re-assigned, so every iteration produces the exact
    # same pred / img_dc / kspc.  Compute once and alias the dict entries.
    pred = run_generator(tag_image_sub, ref_image_full, params)
    img_dc, kspc = run_dc(pred, tag_kspace_full, tag_kspace_mask2d, dft)
    net = {}
    for i in range(1, n_recurrent + 1):
        net[f'r{i}_img_pred'] = pred
        net[f'r{i}_img_dc_pred'] = img_dc
        net[f'r{i}_kspc_img_dc_pred'] = kspc
    return img_dc, net


# -----------------------------------------------------------------------------
# Pure-JAX references for verification
# -----------------------------------------------------------------------------
def generator_ref(x_lr, x_t1, params):
    w1, b1, w2, b2, w3, b3 = params
    N, C, H, W = x_lr.shape
    x = jnp.concatenate([x_lr, x_t1], axis=1)
    x = jnp.transpose(x, (0, 2, 3, 1)).reshape(-1, 2 * C)
    h = jnp.maximum(x @ w1 + b1, 0.0)
    h = jnp.maximum(h @ w2 + b2, 0.0)
    y = h @ w3 + b3 + x[:, :2]
    return jnp.transpose(y.reshape(N, H, W, C), (0, 3, 1, 2))


def dc_ref(pred, k0, mask):
    x = pred[:, 0] + 1j * pred[:, 1]
    k = jnp.fft.fft2(x, norm="ortho")
    kdr = (1.0 - mask[:, 0]) * k.real + mask[:, 0] * k0[:, 0]
    kdi = (1.0 - mask[:, 1]) * k.imag + mask[:, 1] * k0[:, 1]
    img = jnp.fft.ifft2(kdr + 1j * kdi, norm="ortho")
    img_dc = jnp.stack([img.real, img.imag], axis=1)
    kk = jnp.fft.fft2(img.real + 1j * img.imag, norm="ortho")
    kspc = jnp.stack([kk.real, kk.imag], axis=1)
    return img_dc, kspc


if __name__ == "__main__":
    N, C, H, W = 2, 2, 16, 16
    HIDDEN = 32
    N_RECURRENT = 2

    key = jax.random.PRNGKey(0)
    k1, k2, k3, k4, kw1, kw2, kw3, kb = jax.random.split(key, 8)

    tag_image_sub = jax.random.normal(k1, (N, C, H, W), jnp.float32)
    ref_image_full = jax.random.normal(k2, (N, C, H, W), jnp.float32)
    tag_kspace_full = jax.random.normal(k3, (N, C, H, W), jnp.float32)
    m = jax.random.bernoulli(k4, 0.4, (N, 1, H, W)).astype(jnp.float32)
    tag_kspace_mask2d = jnp.concatenate([m, m], axis=1)  # same mask for real/imag

    params = (
        0.05 * jax.random.normal(kw1, (2 * C, HIDDEN), jnp.float32),
        jnp.zeros((1, HIDDEN), jnp.float32),
        0.05 * jax.random.normal(kw2, (HIDDEN, HIDDEN), jnp.float32),
        jnp.zeros((1, HIDDEN), jnp.float32),
        0.05 * jax.random.normal(kw3, (HIDDEN, C), jnp.float32),
        jnp.zeros((1, C), jnp.float32),
    )
    dft = make_dft_mats(H, W)

    recon, net = recurrent_forward(tag_image_sub, ref_image_full, tag_kspace_full,
                                   tag_kspace_mask2d, params, dft, N_RECURRENT)
    recon = jax.block_until_ready(recon)

    # sanity check against pure-JAX reference
    pred_ref = generator_ref(tag_image_sub, ref_image_full, params)
    img_dc_ref, kspc_ref = dc_ref(pred_ref, tag_kspace_full, tag_kspace_mask2d)
    np.testing.assert_allclose(np.asarray(net['r1_img_pred']), np.asarray(pred_ref),
                               rtol=1e-4, atol=1e-4)
    np.testing.assert_allclose(np.asarray(recon), np.asarray(img_dc_ref),
                               rtol=1e-4, atol=1e-4)
    np.testing.assert_allclose(np.asarray(net[f'r{N_RECURRENT}_kspc_img_dc_pred']),
                               np.asarray(kspc_ref), rtol=1e-4, atol=1e-4)

    print("KERNEL_OK")
</pallas_src>

<mosaic_0001>
module attributes {stable_mosaic.version = 11 : i64} {
  func.func @gen_kernel(%arg0: i32, %arg1: memref<1x2x256xf32, #tpu.memory_space<vmem>>, %arg2: memref<1x2x256xf32, #tpu.memory_space<vmem>>, %arg3: memref<32x2xf32, #tpu.memory_space<vmem>>, %arg4: memref<32x2xf32, #tpu.memory_space<vmem>>, %arg5: memref<32x1xf32, #tpu.memory_space<vmem>>, %arg6: memref<32x32xf32, #tpu.memory_space<vmem>>, %arg7: memref<32x1xf32, #tpu.memory_space<vmem>>, %arg8: memref<2x32xf32, #tpu.memory_space<vmem>>, %arg9: memref<2x1xf32, #tpu.memory_space<vmem>>, %arg10: memref<1x2x256xf32, #tpu.memory_space<vmem>>) attributes {dimension_semantics = [#tpu.dimension_semantics<parallel>], iteration_bounds = array<i64: 2>, scalar_prefetch = 0 : i64, scratch_operands = 0 : i64, tpu.core_type = #tpu.core_type<tc>, window_params = [{transform_indices = @transform_0, window_bounds = array<i64: 1, 2, 256>}, {transform_indices = @transform_1, window_bounds = array<i64: 1, 2, 256>}, {pipeline_mode = #tpu.pipeline_mode<synchronous>, transform_indices = @transform_2, window_bounds = array<i64: 32, 2>}, {pipeline_mode = #tpu.pipeline_mode<synchronous>, transform_indices = @transform_3, window_bounds = array<i64: 32, 2>}, {pipeline_mode = #tpu.pipeline_mode<synchronous>, transform_indices = @transform_4, window_bounds = array<i64: 32, 1>}, {pipeline_mode = #tpu.pipeline_mode<synchronous>, transform_indices = @transform_5, window_bounds = array<i64: 32, 32>}, {pipeline_mode = #tpu.pipeline_mode<synchronous>, transform_indices = @transform_6, window_bounds = array<i64: 32, 1>}, {pipeline_mode = #tpu.pipeline_mode<synchronous>, transform_indices = @transform_7, window_bounds = array<i64: 2, 32>}, {pipeline_mode = #tpu.pipeline_mode<synchronous>, transform_indices = @transform_8, window_bounds = array<i64: 2, 1>}, {transform_indices = @transform_9, window_bounds = array<i64: 1, 2, 256>}]} {
    %c0 = arith.constant 0 : index
    %c0_0 = arith.constant 0 : index
    %c0_1 = arith.constant 0 : index
    %0 = vector.load %arg1[%c0, %c0_0, %c0_1] : memref<1x2x256xf32, #tpu.memory_space<vmem>>, vector<1x2x256xf32>
    %1 = vector.shape_cast %0 : vector<1x2x256xf32> to vector<2x256xf32>
    %c0_2 = arith.constant 0 : index
    %c0_3 = arith.constant 0 : index
    %c0_4 = arith.constant 0 : index
    %2 = vector.load %arg2[%c0_2, %c0_3, %c0_4] : memref<1x2x256xf32, #tpu.memory_space<vmem>>, vector<1x2x256xf32>
    %3 = vector.shape_cast %2 : vector<1x2x256xf32> to vector<2x256xf32>
    %c0_5 = arith.constant 0 : index
    %c0_6 = arith.constant 0 : index
    %4 = vector.load %arg3[%c0_5, %c0_6] : memref<32x2xf32, #tpu.memory_space<vmem>>, vector<32x2xf32>
    %cst = arith.constant dense<0.000000e+00> : vector<32x256xf32>
    %5 = tpu.matmul %4, %1, %cst {dimension_numbers = #tpu.dot_dimension_numbers<[1], [0], [0], [1], [0, 0, 1, 1], [], []>} : vector<32x2xf32>, vector<2x256xf32>, vector<32x256xf32> -> vector<32x256xf32>
    %c0_7 = arith.constant 0 : index
    %c0_8 = arith.constant 0 : index
    %6 = vector.load %arg4[%c0_7, %c0_8] : memref<32x2xf32, #tpu.memory_space<vmem>>, vector<32x2xf32>
    %cst_9 = arith.constant dense<0.000000e+00> : vector<32x256xf32>
    %7 = tpu.matmul %6, %3, %cst_9 {dimension_numbers = #tpu.dot_dimension_numbers<[1], [0], [0], [1], [0, 0, 1, 1], [], []>} : vector<32x2xf32>, vector<2x256xf32>, vector<32x256xf32> -> vector<32x256xf32>
    %8 = arith.addf %5, %7 : vector<32x256xf32>
    %c0_10 = arith.constant 0 : index
    %c0_11 = arith.constant 0 : index
    %9 = vector.load %arg5[%c0_10, %c0_11] : memref<32x1xf32, #tpu.memory_space<vmem>>, vector<32x1xf32>
    %10 = vector.broadcast %9 : vector<32x1xf32> to vector<32x256xf32>
    %11 = arith.addf %8, %10 : vector<32x256xf32>
    %cst_12 = arith.constant 0.000000e+00 : f32
    %12 = vector.broadcast %cst_12 : f32 to vector<32x256xf32>
    %13 = arith.maximumf %11, %12 : vector<32x256xf32>
    %c0_13 = arith.constant 0 : index
    %c0_14 = arith.constant 0 : index
    %14 = vector.load %arg6[%c0_13, %c0_14] : memref<32x32xf32, #tpu.memory_space<vmem>>, vector<32x32xf32>
    %cst_15 = arith.constant dense<0.000000e+00> : vector<32x256xf32>
    %15 = tpu.matmul %14, %13, %cst_15 {dimension_numbers = #tpu.dot_dimension_numbers<[1], [0], [0], [1], [0, 0, 1, 1], [], []>} : vector<32x32xf32>, vector<32x256xf32>, vector<32x256xf32> -> vector<32x256xf32>
    %c0_16 = arith.constant 0 : index
    %c0_17 = arith.constant 0 : index
    %16 = vector.load %arg7[%c0_16, %c0_17] : memref<32x1xf32, #tpu.memory_space<vmem>>, vector<32x1xf32>
    %17 = vector.broadcast %16 : vector<32x1xf32> to vector<32x256xf32>
    %18 = arith.addf %15, %17 : vector<32x256xf32>
    %cst_18 = arith.constant 0.000000e+00 : f32
    %19 = vector.broadcast %cst_18 : f32 to vector<32x256xf32>
    %20 = arith.maximumf %18, %19 : vector<32x256xf32>
    %c0_19 = arith.constant 0 : index
    %c0_20 = arith.constant 0 : index
    %21 = vector.load %arg8[%c0_19, %c0_20] : memref<2x32xf32, #tpu.memory_space<vmem>>, vector<2x32xf32>
    %cst_21 = arith.constant dense<0.000000e+00> : vector<2x256xf32>
    %22 = tpu.matmul %21, %20, %cst_21 {dimension_numbers = #tpu.dot_dimension_numbers<[1], [0], [0], [1], [0, 0, 1, 1], [], []>} : vector<2x32xf32>, vector<32x256xf32>, vector<2x256xf32> -> vector<2x256xf32>
    %c0_22 = arith.constant 0 : index
    %c0_23 = arith.constant 0 : index
    %23 = vector.load %arg9[%c0_22, %c0_23] : memref<2x1xf32, #tpu.memory_space<vmem>>, vector<2x1xf32>
    %24 = vector.broadcast %23 : vector<2x1xf32> to vector<2x256xf32>
    %25 = arith.addf %22, %24 : vector<2x256xf32>
    %26 = arith.addf %25, %1 : vector<2x256xf32>
    %c0_24 = arith.constant 0 : index
    %c0_25 = arith.constant 0 : index
    %c0_26 = arith.constant 0 : index
    %27 = vector.load %arg10[%c0_24, %c0_25, %c0_26] : memref<1x2x256xf32, #tpu.memory_space<vmem>>, vector<1x2x256xf32>
    %28 = vector.shape_cast %27 : vector<1x2x256xf32> to vector<2x256xf32>
    %29 = vector.shape_cast %26 : vector<2x256xf32> to vector<1x2x256xf32>
    tpu.vector_store %arg10[%c0_24, %c0_25, %c0_26], %29 {strides = array<i32>} : memref<1x2x256xf32, #tpu.memory_space<vmem>>, vector<1x2x256xf32>,
    return
  }
  func.func @transform_0(%arg0: i32) -> (i32, i32, i32) {
    %c0_i32 = arith.constant 0 : i32
    %c0_i32_0 = arith.constant 0 : i32
    %c0_i32_1 = arith.constant 0 : i32
    return %arg0, %c0_i32, %c0_i32_0 : i32, i32, i32
  }
  func.func @transform_1(%arg0: i32) -> (i32, i32, i32) {
    %c0_i32 = arith.constant 0 : i32
    %c0_i32_0 = arith.constant 0 : i32
    %c0_i32_1 = arith.constant 0 : i32
    return %arg0, %c0_i32, %c0_i32_0 : i32, i32, i32
  }
  func.func @transform_2(%arg0: i32) -> (i32, i32) {
    %c0_i32 = arith.constant 0 : i32
    %c0_i32_0 = arith.constant 0 : i32
    %c0_i32_1 = arith.constant 0 : i32
    return %c0_i32, %c0_i32_0 : i32, i32
  }
  func.func @transform_3(%arg0: i32) -> (i32, i32) {
    %c0_i32 = arith.constant 0 : i32
    %c0_i32_0 = arith.constant 0 : i32
    %c0_i32_1 = arith.constant 0 : i32
    return %c0_i32, %c0_i32_0 : i32, i32
  }
  func.func @transform_4(%arg0: i32) -> (i32, i32) {
    %c0_i32 = arith.constant 0 : i32
    %c0_i32_0 = arith.constant 0 : i32
    %c0_i32_1 = arith.constant 0 : i32
    return %c0_i32, %c0_i32_0 : i32, i32
  }
  func.func @transform_5(%arg0: i32) -> (i32, i32) {
    %c0_i32 = arith.constant 0 : i32
    %c0_i32_0 = arith.constant 0 : i32
    %c0_i32_1 = arith.constant 0 : i32
    return %c0_i32, %c0_i32_0 : i32, i32
  }
  func.func @transform_6(%arg0: i32) -> (i32, i32) {
    %c0_i32 = arith.constant 0 : i32
    %c0_i32_0 = arith.constant 0 : i32
    %c0_i32_1 = arith.constant 0 : i32
    return %c0_i32, %c0_i32_0 : i32, i32
  }
  func.func @transform_7(%arg0: i32) -> (i32, i32) {
    %c0_i32 = arith.constant 0 : i32
    %c0_i32_0 = arith.constant 0 : i32
    %c0_i32_1 = arith.constant 0 : i32
    return %c0_i32, %c0_i32_0 : i32, i32
  }
  func.func @transform_8(%arg0: i32) -> (i32, i32) {
    %c0_i32 = arith.constant 0 : i32
    %c0_i32_0 = arith.constant 0 : i32
    %c0_i32_1 = arith.constant 0 : i32
    return %c0_i32, %c0_i32_0 : i32, i32
  }
  func.func @transform_9(%arg0: i32) -> (i32, i32, i32) {
    %c0_i32 = arith.constant 0 : i32
    %c0_i32_0 = arith.constant 0 : i32
    %c0_i32_1 = arith.constant 0 : i32
    return %arg0, %c0_i32, %c0_i32_0 : i32, i32, i32
  }
}

</mosaic_0001>

<llo_original>
// kernel: tpu_custom_call.1
$region0: #{tpu_custom_call.1}
  #allocation0 [shape = 'u32[]', space=smem, size = 0x4, offset = 0x4, fixed_abs, tag = 'smem constant byte address 0x4 - core index']
  #allocation1 [shape = 'u32[144,128]{1,0:T(1,128)}', space=vmem, size = 0x12000, scoped, tag = 'internal scratch']
  %s0 = inlined_call_operand.vmem [shape: f32[2,2,256], index: 0, kind: input, shape index: {}]
  %s1 = inlined_call_operand.vmem [shape: f32[2,2,256], index: 1, kind: input, shape index: {}]
  %s2 = inlined_call_operand.vmem [shape: f32[32,2], index: 2, kind: input, shape index: {}]
  %s3 = inlined_call_operand.vmem [shape: f32[32,2], index: 3, kind: input, shape index: {}]
  %s4 = inlined_call_operand.vmem [shape: f32[32,1], index: 4, kind: input, shape index: {}]
  %s5 = inlined_call_operand.vmem [shape: f32[32,32], index: 5, kind: input, shape index: {}]
  %s6 = inlined_call_operand.vmem [shape: f32[32,1], index: 6, kind: input, shape index: {}]
  %s7 = inlined_call_operand.vmem [shape: f32[2,32], index: 7, kind: input, shape index: {}]
  %s8 = inlined_call_operand.vmem [shape: f32[2,1], index: 8, kind: input, shape index: {}]
  %s9 = inlined_call_operand.hbm [shape: f32[2,2,256], index: 9, kind: output, shape index: {}]
  %s10 = sld [smem:[#allocation0]]
  $region69: #{tpu_custom_call.1} parent=0
    _
  %s12 = ssub.s32 1, %s10
  %s13 = scalar_select 0, %s12, %s10
  $region1: #{tpu_custom_call.1} parent=0
    #allocation2 [shape = 'u8[4096]{0}', space=vmem, size = 0x1000, scoped, tag = 'output window, operand 0']
    #allocation3 [shape = 's32[2]{0}', space=sflag, size = 0x8, scoped, tag = 'scoped memory for tpu_custom_call.1']
    %14 = vsyncpa [#allocation3], 0
    %s15 = scalar_lea.sflag [#allocation3], 1
    %16 = vsyncpa %s15, 0
    loop: start=0, step=1, limit=4
    $region2: #{tpu_custom_call.1} parent=1 // loop_pre_header
      _
    $region3: #{tpu_custom_call.1} parent=1 // loop_header
      %s18 = sphi 0, %s22
      %p19 = scmp.ge.s32.totalorder %s18, 4
      %s28 = sphi 0, %s30
      %s31 = sphi 0, %s28
      %s32 = sphi 0, %s31
      %s48 = sphi 0, %s32
      %s54 = sphi 0, %s56
      %s57 = sphi 0, %s54
      %s58 = sphi 0, %s57
      %s74 = sphi 0, %s58
      %s78 = sphi 0, %s78
      %s80 = sphi 0, %s78
      %s81 = sphi 0, %s80
      %s95 = sphi 0, %s81
      %s99 = sphi 0, %s99
      %s101 = sphi 0, %s99
      %s102 = sphi 0, %s101
      %s116 = sphi 0, %s102
      %s120 = sphi 0, %s120
      %s122 = sphi 0, %s120
      %s123 = sphi 0, %s122
      %s137 = sphi 0, %s123
      %s141 = sphi 0, %s141
      %s143 = sphi 0, %s141
      %s144 = sphi 0, %s143
      %s158 = sphi 0, %s144
      %s162 = sphi 0, %s162
      %s164 = sphi 0, %s162
      %s165 = sphi 0, %s164
      %s179 = sphi 0, %s165
      %s183 = sphi 0, %s183
      %s185 = sphi 0, %s183
      %s186 = sphi 0, %s185
      %s200 = sphi 0, %s186
      %s204 = sphi 0, %s204
      %s206 = sphi 0, %s204
      %s207 = sphi 0, %s206
      %s221 = sphi 0, %s207
      %s227 = sphi 0, %s229
      %s230 = sphi 0, %s227
      %s231 = sphi 0, %s230
      %s247 = sphi 0, %s231
    $region4: #{tpu_custom_call.1} parent=1 // loop_header_branch
      %21 = sbr.rel (%p19) target = $region8
    $region5: #{tpu_custom_call.1} parent=1 // loop_body
      %s23 = ssub.s32 %s18, 1
      %s24 = ssub.s32 %s18, 2
      %s25 = sadd.s32 %s18, 1
      %s26 = ssub.s32 %s18, %s25
      %p27 = scmp.eq.s32.totalorder %s26, 0
      %s29 = sadd.s32 %s28, 1
      %s30 = scalar_select %p27, %s28, %s29
      %p33 = pneg %p27
      %p34 = scmp.eq.s32.totalorder %s18, 1
      %p35 = por %p33, %p34
      %p36 = scmp.ne.s32.totalorder %s28, %s31
      %p37 = scmp.eq.s32.totalorder %s18, 0
      %p38 = por %p36, %p37
      %p39 = scmp.ne.s32.totalorder %s28, %s31
      %p40 = scmp.eq.s32.totalorder %s23, 1
      %p41 = por %p39, %p40
      %p42 = scmp.ne.s32.totalorder %s31, %s32
      %p43 = scmp.eq.s32.totalorder %s23, 0
      %p44 = por %p42, %p43
      %p45 = scmp.ne.s32.totalorder %s31, %s32
      %p46 = scmp.eq.s32.totalorder %s24, 1
      %p47 = por %p45, %p46
      %p49 = scmp.ne.s32.totalorder %s32, %s48
      %p50 = scmp.eq.s32.totalorder %s24, 0
      %p51 = por %p49, %p50
      %s52 = ssub.s32 %s18, %s25
      %p53 = scmp.eq.s32.totalorder %s52, 0
      %s55 = sadd.s32 %s54, 1
      %s56 = scalar_select %p53, %s54, %s55
      %p59 = pneg %p53
      %p60 = scmp.eq.s32.totalorder %s18, 1
      %p61 = por %p59, %p60
      %p62 = scmp.ne.s32.totalorder %s54, %s57
      %p63 = scmp.eq.s32.totalorder %s18, 0
      %p64 = por %p62, %p63
      %p65 = scmp.ne.s32.totalorder %s54, %s57
      %p66 = scmp.eq.s32.totalorder %s23, 1
      %p67 = por %p65, %p66
      %p68 = scmp.ne.s32.totalorder %s57, %s58
      %p69 = scmp.eq.s32.totalorder %s23, 0
      %p70 = por %p68, %p69
      %p71 = scmp.ne.s32.totalorder %s57, %s58
      %p72 = scmp.eq.s32.totalorder %s24, 1
      %p73 = por %p71, %p72
      %p75 = scmp.ne.s32.totalorder %s58, %s74
      %p76 = scmp.eq.s32.totalorder %s24, 0
      %p77 = por %p75, %p76
      %s79 = sadd.s32 %s78, 1
      %p82 = scmp.eq.s32.totalorder %s18, 1
      %p83 = scmp.ne.s32.totalorder %s78, %s80
      %p84 = scmp.eq.s32.totalorder %s18, 0
      %p85 = por %p83, %p84
      %p86 = scmp.ne.s32.totalorder %s78, %s80
      %p87 = scmp.eq.s32.totalorder %s23, 1
      %p88 = por %p86, %p87
      %p89 = scmp.ne.s32.totalorder %s80, %s81
      %p90 = scmp.eq.s32.totalorder %s23, 0
      %p91 = por %p89, %p90
      %p92 = scmp.ne.s32.totalorder %s80, %s81
      %p93 = scmp.eq.s32.totalorder %s24, 1
      %p94 = por %p92, %p93
      %p96 = scmp.ne.s32.totalorder %s81, %s95
      %p97 = scmp.eq.s32.totalorder %s24, 0
      %p98 = por %p96, %p97
      %s100 = sadd.s32 %s99, 1
      %p103 = scmp.eq.s32.totalorder %s18, 1
      %p104 = scmp.ne.s32.totalorder %s99, %s101
      %p105 = scmp.eq.s32.totalorder %s18, 0
      %p106 = por %p104, %p105
      %p107 = scmp.ne.s32.totalorder %s99, %s101
      %p108 = scmp.eq.s32.totalorder %s23, 1
      %p109 = por %p107, %p108
      %p110 = scmp.ne.s32.totalorder %s101, %s102
      %p111 = scmp.eq.s32.totalorder %s23, 0
      %p112 = por %p110, %p111
      %p113 = scmp.ne.s32.totalorder %s101, %s102
      %p114 = scmp.eq.s32.totalorder %s24, 1
      %p115 = por %p113, %p114
      %p117 = scmp.ne.s32.totalorder %s102, %s116
      %p118 = scmp.eq.s32.totalorder %s24, 0
      %p119 = por %p117, %p118
      %s121 = sadd.s32 %s120, 1
      %p124 = scmp.eq.s32.totalorder %s18, 1
      %p125 = scmp.ne.s32.totalorder %s120, %s122
      %p126 = scmp.eq.s32.totalorder %s18, 0
      %p127 = por %p125, %p126
      %p128 = scmp.ne.s32.totalorder %s120, %s122
      %p129 = scmp.eq.s32.totalorder %s23, 1
      %p130 = por %p128, %p129
      %p131 = scmp.ne.s32.totalorder %s122, %s123
      %p132 = scmp.eq.s32.totalorder %s23, 0
      %p133 = por %p131, %p132
      %p134 = scmp.ne.s32.totalorder %s122, %s123
      %p135 = scmp.eq.s32.totalorder %s24, 1
      %p136 = por %p134, %p135
      %p138 = scmp.ne.s32.totalorder %s123, %s137
      %p139 = scmp.eq.s32.totalorder %s24, 0
      %p140 = por %p138, %p139
      %s142 = sadd.s32 %s141, 1
      %p145 = scmp.eq.s32.totalorder %s18, 1
      %p146 = scmp.ne.s32.totalorder %s141, %s143
      %p147 = scmp.eq.s32.totalorder %s18, 0
      %p148 = por %p146, %p147
      %p149 = scmp.ne.s32.totalorder %s141, %s143
      %p150 = scmp.eq.s32.totalorder %s23, 1
      %p151 = por %p149, %p150
      %p152 = scmp.ne.s32.totalorder %s143, %s144
      %p153 = scmp.eq.s32.totalorder %s23, 0
      %p154 = por %p152, %p153
      %p155 = scmp.ne.s32.totalorder %s143, %s144
      %p156 = scmp.eq.s32.totalorder %s24, 1
      %p157 = por %p155, %p156
      %p159 = scmp.ne.s32.totalorder %s144, %s158
      %p160 = scmp.eq.s32.totalorder %s24, 0
      %p161 = por %p159, %p160
      %s163 = sadd.s32 %s162, 1
      %p166 = scmp.eq.s32.totalorder %s18, 1
      %p167 = scmp.ne.s32.totalorder %s162, %s164
      %p168 = scmp.eq.s32.totalorder %s18, 0
      %p169 = por %p167, %p168
      %p170 = scmp.ne.s32.totalorder %s162, %s164
      %p171 = scmp.eq.s32.totalorder %s23, 1
      %p172 = por %p170, %p171
      %p173 = scmp.ne.s32.totalorder %s164, %s165
      %p174 = scmp.eq.s32.totalorder %s23, 0
      %p175 = por %p173, %p174
      %p176 = scmp.ne.s32.totalorder %s164, %s165
      %p177 = scmp.eq.s32.totalorder %s24, 1
      %p178 = por %p176, %p177
      %p180 = scmp.ne.s32.totalorder %s165, %s179
      %p181 = scmp.eq.s32.totalorder %s24, 0
      %p182 = por %p180, %p181
      %s184 = sadd.s32 %s183, 1
      %p187 = scmp.eq.s32.totalorder %s18, 1
      %p188 = scmp.ne.s32.totalorder %s183, %s185
      %p189 = scmp.eq.s32.totalorder %s18, 0
      %p190 = por %p188, %p189
      %p191 = scmp.ne.s32.totalorder %s183, %s185
      %p192 = scmp.eq.s32.totalorder %s23, 1
      %p193 = por %p191, %p192
      %p194 = scmp.ne.s32.totalorder %s185, %s186
      %p195 = scmp.eq.s32.totalorder %s23, 0
      %p196 = por %p194, %p195
      %p197 = scmp.ne.s32.totalorder %s185, %s186
      %p198 = scmp.eq.s32.totalorder %s24, 1
      %p199 = por %p197, %p198
      %p201 = scmp.ne.s32.totalorder %s186, %s200
      %p202 = scmp.eq.s32.totalorder %s24, 0
      %p203 = por %p201, %p202
      %s205 = sadd.s32 %s204, 1
      %p208 = scmp.eq.s32.totalorder %s18, 1
      %p209 = scmp.ne.s32.totalorder %s204, %s206
      %p210 = scmp.eq.s32.totalorder %s18, 0
      %p211 = por %p209, %p210
      %p212 = scmp.ne.s32.totalorder %s204, %s206
      %p213 = scmp.eq.s32.totalorder %s23, 1
      %p214 = por %p212, %p213
      %p215 = scmp.ne.s32.totalorder %s206, %s207
      %p216 = scmp.eq.s32.totalorder %s23, 0
      %p217 = por %p215, %p216
      %p218 = scmp.ne.s32.totalorder %s206, %s207
      %p219 = scmp.eq.s32.totalorder %s24, 1
      %p220 = por %p218, %p219
      %p222 = scmp.ne.s32.totalorder %s207, %s221
      %p223 = scmp.eq.s32.totalorder %s24, 0
      %p224 = por %p222, %p223
      %s225 = ssub.s32 %s18, %s25
      %p226 = scmp.eq.s32.totalorder %s225, 0
      %s228 = sadd.s32 %s227, 1
      %s229 = scalar_select %p226, %s227, %s228
      %p232 = pneg %p226
      %p233 = scmp.eq.s32.totalorder %s18, 1
      %p234 = por %p232, %p233
      %p235 = scmp.ne.s32.totalorder %s227, %s230
      %p236 = scmp.eq.s32.totalorder %s18, 0
      %p237 = por %p235, %p236
      %p238 = scmp.ne.s32.totalorder %s227, %s230
      %p239 = scmp.eq.s32.totalorder %s23, 1
      %p240 = por %p238, %p239
      %p241 = scmp.ne.s32.totalorder %s230, %s231
      %p242 = scmp.eq.s32.totalorder %s23, 0
      %p243 = por %p241, %p242
      %p244 = scmp.ne.s32.totalorder %s230, %s231
      %p245 = scmp.eq.s32.totalorder %s24, 1
      %p246 = por %p244, %p245
      %p248 = scmp.ne.s32.totalorder %s231, %s247
      %p249 = scmp.eq.s32.totalorder %s24, 0
      %p250 = por %p248, %p249
      %p251 = scmp.le.s32.totalorder 1, %s18
      %p252 = scmp.lt.s32.totalorder %s18, 3
      %p253 = pnand %p251, %p252
      %p254 = pneg %p253
      // Predicated region
      $region9: #{tpu_custom_call.1} parent=5 // pred_check
        _
      $region10: #{tpu_custom_call.1} parent=5 // pred_check_branch
        %256 = sbr.rel (%p253) target = $region12
      $region11: #{tpu_custom_call.1} parent=5 // pred_region
        %s257 = ssub.s32 %s18, 1
        // Predicated region
        $region13: #{tpu_custom_call.1} parent=11 // pred_check
          %p258 = pneg %p91
        $region14: #{tpu_custom_call.1} parent=11 // pred_check_branch
          %260 = sbr.rel (%p258) target = $region16
        $region15: #{tpu_custom_call.1} parent=11 // pred_region
          _
        $region16: #{tpu_custom_call.1} parent=11 // pred_fallthru
          _
        // Predicated region
        $region17: #{tpu_custom_call.1} parent=11 // pred_check
          %p261 = pneg %p112
        $region18: #{tpu_custom_call.1} parent=11 // pred_check_branch
          %263 = sbr.rel (%p261) target = $region20
        $region19: #{tpu_custom_call.1} parent=11 // pred_region
          _
        $region20: #{tpu_custom_call.1} parent=11 // pred_fallthru
          _
        // Predicated region
        $region21: #{tpu_custom_call.1} parent=11 // pred_check
          %p264 = pneg %p133
        $region22: #{tpu_custom_call.1} parent=11 // pred_check_branch
          %266 = sbr.rel (%p264) target = $region24
        $region23: #{tpu_custom_call.1} parent=11 // pred_region
          _
        $region24: #{tpu_custom_call.1} parent=11 // pred_fallthru
          _
        // Predicated region
        $region25: #{tpu_custom_call.1} parent=11 // pred_check
          %p267 = pneg %p154
        $region26: #{tpu_custom_call.1} parent=11 // pred_check_branch
          %269 = sbr.rel (%p267) target = $region28
        $region27: #{tpu_custom_call.1} parent=11 // pred_region
          _
        $region28: #{tpu_custom_call.1} parent=11 // pred_fallthru
          _
        // Predicated region
        $region29: #{tpu_custom_call.1} parent=11 // pred_check
          %p270 = pneg %p175
        $region30: #{tpu_custom_call.1} parent=11 // pred_check_branch
          %272 = sbr.rel (%p270) target = $region32
        $region31: #{tpu_custom_call.1} parent=11 // pred_region
          _
        $region32: #{tpu_custom_call.1} parent=11 // pred_fallthru
          _
        // Predicated region
        $region33: #{tpu_custom_call.1} parent=11 // pred_check
          %p273 = pneg %p196
        $region34: #{tpu_custom_call.1} parent=11 // pred_check_branch
          %275 = sbr.rel (%p273) target = $region36
        $region35: #{tpu_custom_call.1} parent=11 // pred_region
          _
        $region36: #{tpu_custom_call.1} parent=11 // pred_fallthru
          _
        // Predicated region
        $region37: #{tpu_custom_call.1} parent=11 // pred_check
          %p276 = pneg %p217
        $region38: #{tpu_custom_call.1} parent=11 // pred_check_branch
          %278 = sbr.rel (%p276) target = $region40
        $region39: #{tpu_custom_call.1} parent=11 // pred_region
          _
        $region40: #{tpu_custom_call.1} parent=11 // pred_fallthru
          _
      $region12: #{tpu_custom_call.1} parent=5 // pred_fallthru
        _
      %p279 = scmp.lt.s32.totalorder %s18, 2
      // Predicated region
      $region41: #{tpu_custom_call.1} parent=5 // pred_check
        %p280 = pneg %p279
      $region42: #{tpu_custom_call.1} parent=5 // pred_check_branch
        %282 = sbr.rel (%p280) target = $region44
      $region43: #{tpu_custom_call.1} parent=5 // pred_region
        // Predicated region
        $region45: #{tpu_custom_call.1} parent=43 // pred_check
          %p283 = pneg %p38
        $region46: #{tpu_custom_call.1} parent=43 // pred_check_branch
          %285 = sbr.rel (%p283) target = $region48
        $region47: #{tpu_custom_call.1} parent=43 // pred_region
          %p286 = scmp.lt.s32.totalorder %s18, 1
          %s287 = scalar_select %p286, %s18, 1
          %s288 = smul.addr %s287, 2
          %s289 = smul.addr %s288, 2
          %s290 = scalar_lea.vmem %s0, %s289
        $region48: #{tpu_custom_call.1} parent=43 // pred_fallthru
          _
        // Predicated region
        $region49: #{tpu_custom_call.1} parent=43 // pred_check
          %p291 = pneg %p64
        $region50: #{tpu_custom_call.1} parent=43 // pred_check_branch
          %293 = sbr.rel (%p291) target = $region52
        $region51: #{tpu_custom_call.1} parent=43 // pred_region
          %p294 = scmp.lt.s32.totalorder %s18, 1
          %s295 = scalar_select %p294, %s18, 1
          %s296 = smul.addr %s295, 2
          %s297 = smul.addr %s296, 2
          %s298 = scalar_lea.vmem %s1, %s297
        $region52: #{tpu_custom_call.1} parent=43 // pred_fallthru
          _
      $region44: #{tpu_custom_call.1} parent=5 // pred_fallthru
        _
      %p299 = scmp.le.s32.totalorder 1, %s18
      %p300 = scmp.lt.s32.totalorder %s18, 3
      %p301 = pnand %p299, %p300
      %p302 = pneg %p301
      // Predicated region
      $region53: #{tpu_custom_call.1} parent=5 // pred_check
        _
      $region54: #{tpu_custom_call.1} parent=5 // pred_check_branch
        %304 = sbr.rel (%p301) target = $region56
      $region55: #{tpu_custom_call.1} parent=5 // pred_region
        %s305 = ssub.s32 %s18, 1
        %p306 = scmp.lt.s32.totalorder %s23, 1
        %s307 = scalar_select %p306, %s23, 1
        %s308 = smul.addr %s307, 2
        %s309 = smul.addr %s308, 2
        %s310 = scalar_lea.vmem %s0, %s309
        %p311 = pneg %p44
        %p312 = pneg %p41
        %p313 = scmp.lt.s32.totalorder %s23, 1
        %s314 = scalar_select %p313, %s23, 1
        %s315 = smul.addr %s314, 2
        %s316 = smul.addr %s315, 2
        %s317 = scalar_lea.vmem %s1, %s316
        %p318 = pneg %p70
        %p319 = pneg %p67
        %p320 = pneg %p91
        %p321 = pneg %p88
        %p322 = pneg %p112
        %p323 = pneg %p109
        %p324 = pneg %p133
        %p325 = pneg %p130
        %p326 = pneg %p154
        %p327 = pneg %p151
        %p328 = pneg %p175
        %p329 = pneg %p172
        %p330 = pneg %p196
        %p331 = pneg %p193
        %p332 = pneg %p217
        %p333 = pneg %p214
        %p334 = pneg %p243
        %p335 = pneg %p240
        %s336 = sand.u32 %s230, 1
        %s337 = scalar_lea.sflag [#allocation3], %s336
        %s338 = sand.u32 %s230, 1
        %s339 = smul.addr %s338, 4
        %s340 = scalar_lea.vmem [#allocation2], %s339
        %p341 = scmp.lt.s32.totalorder %s23, 1
        %s342 = scalar_select %p341, %s23, 1
        %s343 = smul.addr %s342, 2
        %s344 = smul.addr %s343, 2
        %s345 = scalar_lea.vmem %s0, %s344
        %p346 = scmp.lt.s32.totalorder %s23, 1
        %s347 = scalar_select %p346, %s23, 1
        %s348 = smul.addr %s347, 2
        %s349 = smul.addr %s348, 2
        %s350 = scalar_lea.vmem %s1, %s349
        %v351 = vld [vmem:[%s345] sm:$0xf]
        %v352 = vld [vmem:[%s350] sm:$0xf]
        %v353 = vld [vmem:[%s2] sm:$0xff]
        %v354 = vld [vmem:[%s2 + $0x8] sm:$0xff]
        %v355 = vld [vmem:[%s2 + $0x10] sm:$0xff]
        %v356 = vld [vmem:[%s2 + $0x18] sm:$0xff]
        %v357 = vld [vmem:[%s3] sm:$0xff]
        %v358 = vld [vmem:[%s3 + $0x8] sm:$0xff]
        %v359 = vld [vmem:[%s3 + $0x10] sm:$0xff]
        %v360 = vld [vmem:[%s3 + $0x18] sm:$0xff]
        %v363 = vunpack.c.l.s4 1983009808
        %v364 = vunpack.c.0.s8 %v363
        %v365 = vlaneseq
        %v366 = vshrl.u32 %v365, 7
        %v367 = vsub.s32 %v364, %v366
        %v368 = vrot.slane %v352, %v367
        %v369 = vcombine.high %v368, %v368
        %vm370 = vcmask 15360
        %v372 = vsel %vm370, %v357, 0
        %v375 = vsel %vm370, %v358, 0
        %v378 = vsel %vm370, %v359, 0
        %v381 = vsel %vm370, %v360, 0
        %vm383 = vcmask 1041408
        %v384 = vsel %vm383, %v368, 0
        %v386 = vsel %vm383, %v369, 0
        %388 = vmatprep.subr.mxu0 0.0
        %389 = vmatpush1.msra.mxu0 0.0
        %390 = vmatprep.subr.mxu0 0.0
        %391 = vmatpush1.msra.mxu0 0.0
        %392 = vmatprep.subr.mxu0 0.0
        %393 = vmatpush1.msra.mxu0 0.0
        %394 = vmatprep.subr.mxu0 0.0
        %395 = vmatpush1.msra.mxu0 0.0
        %396 = vmatprep.subr.mxu0 0.0
        %397 = vmatpush1.msra.mxu0 0.0
        %398 = vmatprep.subr.mxu0 0.0
        %399 = vmatpush1.msra.mxu0 0.0
        %400 = vmatprep.subr.mxu0 0.0
        %401 = vmatpush1.msra.mxu0 0.0
        %402 = vmatprep.subr.mxu0 0.0
        %403 = vmatpush1.msra.mxu0 0.0
        %404 = vmatprep.subr.mxu0 0.0
        %405 = vmatpush1.msra.mxu0 0.0
        %406 = vmatprep.subr.mxu0 0.0
        %407 = vmatpush1.msra.mxu0 0.0
        %408 = vmatprep.subr.mxu0 0.0
        %409 = vmatpush1.msra.mxu0 0.0
        %410 = vmatprep.subr.mxu0 0.0
        %411 = vmatpush1.msra.mxu0 0.0
        %412 = vmatprep.subr.mxu0 0.0
        %413 = vmatpush1.msra.mxu0 0.0
        %414 = vmatprep.subr.mxu0 0.0
        %415 = vmatpush1.msra.mxu0 0.0
        %416 = vmatprep.subr.mxu0 0.0
        %417 = vmatpush1.msra.mxu0 0.0
        %418 = vmatprep.subr.mxu0 %v386
        %419 = vmatpush1.msra.mxu0 %v384
        %420 = vmatprep.subr.mxu0 0.0
        %421 = vmatpush2.msra.mxu0 0.0
        %422 = vmatprep.subr.mxu0 0.0
        %423 = vmatpush2.msra.mxu0 0.0
        %424 = vmatprep.subr.mxu0 0.0
        %425 = vmatpush2.msra.mxu0 0.0
        %426 = vmatprep.subr.mxu0 0.0
        %427 = vmatpush2.msra.mxu0 0.0
        %428 = vmatprep.subr.mxu0 0.0
        %429 = vmatpush2.msra.mxu0 0.0
        %430 = vmatprep.subr.mxu0 0.0
        %431 = vmatpush2.msra.mxu0 0.0
        %432 = vmatprep.subr.mxu0 0.0
        %433 = vmatpush2.msra.mxu0 0.0
        %434 = vmatprep.subr.mxu0 0.0
        %435 = vmatpush2.msra.mxu0 0.0
        %436 = vmatprep.subr.mxu0 0.0
        %437 = vmatpush2.msra.mxu0 0.0
        %438 = vmatprep.subr.mxu0 0.0
        %439 = vmatpush2.msra.mxu0 0.0
        %440 = vmatprep.subr.mxu0 0.0
        %441 = vmatpush2.msra.mxu0 0.0
        %442 = vmatprep.subr.mxu0 0.0
        %443 = vmatpush2.msra.mxu0 0.0
        %444 = vmatprep.subr.mxu0 0.0
        %445 = vmatpush2.msra.mxu0 0.0
        %446 = vmatprep.subr.mxu0 0.0
        %447 = vmatpush2.msra.mxu0 0.0
        %448 = vmatprep.subr.mxu0 0.0
        %449 = vmatpush2.msra.mxu0 0.0
        %450 = vmatprep.subr.mxu0 0.0
        %451 = vmatpush2.msra.mxu0 0.0
        %452 = vmatprep.mubr.f32.mxu0 0.0
        %453 = vmatmul.mubr.f32.gmra.mxu0 %v372
        %v454 = vpop.f32.mrf.mxu0
        %v455 = vadd.f32 0.0, %v454
        %v456 = vpop.f32.mrf.mxu0
        %v457 = vadd.f32 0.0, %v456
        %458 = vmatprep.mubr.f32.mxu0 0.0
        %459 = vmatmul.mubr.f32.gmra.mxu0 %v375
        %v460 = vpop.f32.mrf.mxu0
        %v461 = vadd.f32 0.0, %v460
        %v462 = vpop.f32.mrf.mxu0
        %v463 = vadd.f32 0.0, %v462
        %464 = vmatprep.mubr.f32.mxu0 0.0
        %465 = vmatmul.mubr.f32.gmra.mxu0 %v378
        %v466 = vpop.f32.mrf.mxu0
        %v467 = vadd.f32 0.0, %v466
        %v468 = vpop.f32.mrf.mxu0
        %v469 = vadd.f32 0.0, %v468
        %470 = vmatprep.mubr.f32.mxu0 0.0
        %471 = vmatmul.mubr.f32.gmra.mxu0 %v381
        %v472 = vpop.f32.mrf.mxu0
        %v473 = vadd.f32 0.0, %v472
        %v474 = vpop.f32.mrf.mxu0
        %v475 = vadd.f32 0.0, %v474
        %476 = vdwg.mxu0
        %v479 = vunpack.c.l.s4 1983009808
        %v480 = vunpack.c.0.s8 %v479
        %v481 = vlaneseq
        %v482 = vshrl.u32 %v481, 7
        %v483 = vsub.s32 %v480, %v482
        %v484 = vrot.slane %v351, %v483
        %v485 = vcombine.high %v484, %v484
        %v487 = vsel %vm370, %v353, 0
        %v490 = vsel %vm370, %v354, 0
        %v493 = vsel %vm370, %v355, 0
        %v496 = vsel %vm370, %v356, 0
        %v498 = vsel %vm383, %v484, 0
        %v500 = vsel %vm383, %v485, 0
        %502 = vmatprep.subr.mxu0 0.0
        %503 = vmatpush1.msra.mxu0 0.0
        %504 = vmatprep.subr.mxu0 0.0
        %505 = vmatpush1.msra.mxu0 0.0
        %506 = vmatprep.subr.mxu0 0.0
        %507 = vmatpush1.msra.mxu0 0.0
        %508 = vmatprep.subr.mxu0 0.0
        %509 = vmatpush1.msra.mxu0 0.0
        %510 = vmatprep.subr.mxu0 0.0
        %511 = vmatpush1.msra.mxu0 0.0
        %512 = vmatprep.subr.mxu0 0.0
        %513 = vmatpush1.msra.mxu0 0.0
        %514 = vmatprep.subr.mxu0 0.0
        %515 = vmatpush1.msra.mxu0 0.0
        %516 = vmatprep.subr.mxu0 0.0
        %517 = vmatpush1.msra.mxu0 0.0
        %518 = vmatprep.subr.mxu0 0.0
        %519 = vmatpush1.msra.mxu0 0.0
        %520 = vmatprep.subr.mxu0 0.0
        %521 = vmatpush1.msra.mxu0 0.0
        %522 = vmatprep.subr.mxu0 0.0
        %523 = vmatpush1.msra.mxu0 0.0
        %524 = vmatprep.subr.mxu0 0.0
        %525 = vmatpush1.msra.mxu0 0.0
        %526 = vmatprep.subr.mxu0 0.0
        %527 = vmatpush1.msra.mxu0 0.0
        %528 = vmatprep.subr.mxu0 0.0
        %529 = vmatpush1.msra.mxu0 0.0
        %530 = vmatprep.subr.mxu0 0.0
        %531 = vmatpush1.msra.mxu0 0.0
        %532 = vmatprep.subr.mxu0 %v500
        %533 = vmatpush1.msra.mxu0 %v498
        %534 = vmatprep.subr.mxu0 0.0
        %535 = vmatpush2.msra.mxu0 0.0
        %536 = vmatprep.subr.mxu0 0.0
        %537 = vmatpush2.msra.mxu0 0.0
        %538 = vmatprep.subr.mxu0 0.0
        %539 = vmatpush2.msra.mxu0 0.0
        %540 = vmatprep.subr.mxu0 0.0
        %541 = vmatpush2.msra.mxu0 0.0
        %542 = vmatprep.subr.mxu0 0.0
        %543 = vmatpush2.msra.mxu0 0.0
        %544 = vmatprep.subr.mxu0 0.0
        %545 = vmatpush2.msra.mxu0 0.0
        %546 = vmatprep.subr.mxu0 0.0
        %547 = vmatpush2.msra.mxu0 0.0
        %548 = vmatprep.subr.mxu0 0.0
        %549 = vmatpush2.msra.mxu0 0.0
        %550 = vmatprep.subr.mxu0 0.0
        %551 = vmatpush2.msra.mxu0 0.0
        %552 = vmatprep.subr.mxu0 0.0
        %553 = vmatpush2.msra.mxu0 0.0
        %554 = vmatprep.subr.mxu0 0.0
        %555 = vmatpush2.msra.mxu0 0.0
        %556 = vmatprep.subr.mxu0 0.0
        %557 = vmatpush2.msra.mxu0 0.0
        %558 = vmatprep.subr.mxu0 0.0
        %559 = vmatpush2.msra.mxu0 0.0
        %560 = vmatprep.subr.mxu0 0.0
        %561 = vmatpush2.msra.mxu0 0.0
        %562 = vmatprep.subr.mxu0 0.0
        %563 = vmatpush2.msra.mxu0 0.0
        %564 = vmatprep.subr.mxu0 0.0
        %565 = vmatpush2.msra.mxu0 0.0
        %566 = vmatprep.mubr.f32.mxu0 0.0
        %567 = vmatmul.mubr.f32.gmra.mxu0 %v487
        %v568 = vpop.f32.mrf.mxu0
        %v569 = vadd.f32 %v455, %v568
        %v570 = vpop.f32.mrf.mxu0
        %v571 = vadd.f32 %v457, %v570
        %572 = vmatprep.mubr.f32.mxu0 0.0
        %573 = vmatmul.mubr.f32.gmra.mxu0 %v490
        %v574 = vpop.f32.mrf.mxu0
        %v575 = vadd.f32 %v461, %v574
        %v576 = vpop.f32.mrf.mxu0
        %v577 = vadd.f32 %v463, %v576
        %578 = vmatprep.mubr.f32.mxu0 0.0
        %579 = vmatmul.mubr.f32.gmra.mxu0 %v493
        %v580 = vpop.f32.mrf.mxu0
        %v581 = vadd.f32 %v467, %v580
        %v582 = vpop.f32.mrf.mxu0
        %v583 = vadd.f32 %v469, %v582
        %584 = vmatprep.mubr.f32.mxu0 0.0
        %585 = vmatmul.mubr.f32.gmra.mxu0 %v496
        %v586 = vpop.f32.mrf.mxu0
        %v587 = vadd.f32 %v473, %v586
        %v588 = vpop.f32.mrf.mxu0
        %v589 = vadd.f32 %v475, %v588
        %590 = vdwg.mxu0
        %v591 = vld [vmem:[%s4] sm:$0xff]
        %v592 = vld [vmem:[%s4 + $0x8] sm:$0xff]
        %v593 = vld [vmem:[%s4 + $0x10] sm:$0xff]
        %v594 = vld [vmem:[%s4 + $0x18] sm:$0xff]
        %596 = vset.pattern.permute.xlu0 0
        %597 = vperm.xlu0 %596, %v591
        %v598 = vpop.permute.xlu0 %597
        %601 = vset.pattern.permute.xlu0 0
        %602 = vperm.xlu0 %601, %v592
        %v603 = vpop.permute.xlu0 %602
        %606 = vset.pattern.permute.xlu0 0
        %607 = vperm.xlu0 %606, %v593
        %v608 = vpop.permute.xlu0 %607
        %611 = vset.pattern.permute.xlu0 0
        %612 = vperm.xlu0 %611, %v594
        %v613 = vpop.permute.xlu0 %612
        %v615 = vadd.f32 %v569, %v598
        %v616 = vadd.f32 %v571, %v598
        %v617 = vadd.f32 %v575, %v603
        %v618 = vadd.f32 %v577, %v603
        %v619 = vadd.f32 %v581, %v608
        %v620 = vadd.f32 %v583, %v608
        %v621 = vadd.f32 %v587, %v613
        %v622 = vadd.f32 %v589, %v613
        %v623 = vmax.f32 %v615, 0.0
        %v624 = vmax.f32 %v616, 0.0
        %v625 = vmax.f32 %v617, 0.0
        %v626 = vmax.f32 %v618, 0.0
        %v627 = vmax.f32 %v619, 0.0
        %v628 = vmax.f32 %v620, 0.0
        %v629 = vmax.f32 %v621, 0.0
        %v630 = vmax.f32 %v622, 0.0
        %v631 = vld [vmem:[%s5] sm:$0xff]
        %v632 = vld [vmem:[%s5 + $0x8] sm:$0xff]
        %v633 = vld [vmem:[%s5 + $0x10] sm:$0xff]
        %v634 = vld [vmem:[%s5 + $0x18] sm:$0xff]
        %v635 = vld [vmem:[%s6] sm:$0xff]
        %v636 = vld [vmem:[%s6 + $0x8] sm:$0xff]
        %v637 = vld [vmem:[%s6 + $0x10] sm:$0xff]
        %v638 = vld [vmem:[%s6 + $0x18] sm:$0xff]
        %640 = vset.pattern.permute.xlu0 0
        %641 = vperm.xlu0 %640, %v635
        %v642 = vpop.permute.xlu0 %641
        %645 = vset.pattern.permute.xlu0 0
        %646 = vperm.xlu0 %645, %v636
        %v647 = vpop.permute.xlu0 %646
        %650 = vset.pattern.permute.xlu0 0
        %651 = vperm.xlu0 %650, %v637
        %v652 = vpop.permute.xlu0 %651
        %655 = vset.pattern.permute.xlu0 0
        %656 = vperm.xlu0 %655, %v638
        %v657 = vpop.permute.xlu0 %656
        %vm659 = vcmask 261120
        %v661 = vsel %vm659, %v631, 0
        %v664 = vsel %vm659, %v632, 0
        %v667 = vsel %vm659, %v633, 0
        %v670 = vsel %vm659, %v634, 0
        %672 = vmatprep.subr.mxu0 0.0
        %673 = vmatpush1.msra.mxu0 0.0
        %674 = vmatprep.subr.mxu0 0.0
        %675 = vmatpush1.msra.mxu0 0.0
        %676 = vmatprep.subr.mxu0 0.0
        %677 = vmatpush1.msra.mxu0 0.0
        %678 = vmatprep.subr.mxu0 0.0
        %679 = vmatpush1.msra.mxu0 0.0
        %680 = vmatprep.subr.mxu0 0.0
        %681 = vmatpush1.msra.mxu0 0.0
        %682 = vmatprep.subr.mxu0 0.0
        %683 = vmatpush1.msra.mxu0 0.0
        %684 = vmatprep.subr.mxu0 0.0
        %685 = vmatpush1.msra.mxu0 0.0
        %686 = vmatprep.subr.mxu0 0.0
        %687 = vmatpush1.msra.mxu0 0.0
        %688 = vmatprep.subr.mxu0 0.0
        %689 = vmatpush1.msra.mxu0 0.0
        %690 = vmatprep.subr.mxu0 0.0
        %691 = vmatpush1.msra.mxu0 0.0
        %692 = vmatprep.subr.mxu0 0.0
        %693 = vmatpush1.msra.mxu0 0.0
        %694 = vmatprep.subr.mxu0 0.0
        %695 = vmatpush1.msra.mxu0 0.0
        %696 = vmatprep.subr.mxu0 %v630
        %697 = vmatpush1.msra.mxu0 %v629
        %698 = vmatprep.subr.mxu0 %v628
        %699 = vmatpush1.msra.mxu0 %v627
        %700 = vmatprep.subr.mxu0 %v626
        %701 = vmatpush1.msra.mxu0 %v625
        %702 = vmatprep.subr.mxu0 %v624
        %703 = vmatpush1.msra.mxu0 %v623
        %704 = vmatprep.subr.mxu0 0.0
        %705 = vmatpush2.msra.mxu0 0.0
        %706 = vmatprep.subr.mxu0 0.0
        %707 = vmatpush2.msra.mxu0 0.0
        %708 = vmatprep.subr.mxu0 0.0
        %709 = vmatpush2.msra.mxu0 0.0
        %710 = vmatprep.subr.mxu0 0.0
        %711 = vmatpush2.msra.mxu0 0.0
        %712 = vmatprep.subr.mxu0 0.0
        %713 = vmatpush2.msra.mxu0 0.0
        %714 = vmatprep.subr.mxu0 0.0
        %715 = vmatpush2.msra.mxu0 0.0
        %716 = vmatprep.subr.mxu0 0.0
        %717 = vmatpush2.msra.mxu0 0.0
        %718 = vmatprep.subr.mxu0 0.0
        %719 = vmatpush2.msra.mxu0 0.0
        %720 = vmatprep.subr.mxu0 0.0
        %721 = vmatpush2.msra.mxu0 0.0
        %722 = vmatprep.subr.mxu0 0.0
        %723 = vmatpush2.msra.mxu0 0.0
        %724 = vmatprep.subr.mxu0 0.0
        %725 = vmatpush2.msra.mxu0 0.0
        %726 = vmatprep.subr.mxu0 0.0
        %727 = vmatpush2.msra.mxu0 0.0
        %728 = vmatprep.subr.mxu0 0.0
        %729 = vmatpush2.msra.mxu0 0.0
        %730 = vmatprep.subr.mxu0 0.0
        %731 = vmatpush2.msra.mxu0 0.0
        %732 = vmatprep.subr.mxu0 0.0
        %733 = vmatpush2.msra.mxu0 0.0
        %734 = vmatprep.subr.mxu0 0.0
        %735 = vmatpush2.msra.mxu0 0.0
        %736 = vmatprep.mubr.f32.mxu0 0.0
        %737 = vmatmul.mubr.f32.gmra.mxu0 %v661
        %v738 = vpop.f32.mrf.mxu0
        %v739 = vadd.f32 %v642, %v738
        %v740 = vpop.f32.mrf.mxu0
        %v741 = vadd.f32 %v642, %v740
        %742 = vmatprep.mubr.f32.mxu0 0.0
        %743 = vmatmul.mubr.f32.gmra.mxu0 %v664
        %v744 = vpop.f32.mrf.mxu0
        %v745 = vadd.f32 %v647, %v744
        %v746 = vpop.f32.mrf.mxu0
        %v747 = vadd.f32 %v647, %v746
        %748 = vmatprep.mubr.f32.mxu0 0.0
        %749 = vmatmul.mubr.f32.gmra.mxu0 %v667
        %v750 = vpop.f32.mrf.mxu0
        %v751 = vadd.f32 %v652, %v750
        %v752 = vpop.f32.mrf.mxu0
        %v753 = vadd.f32 %v652, %v752
        %754 = vmatprep.mubr.f32.mxu0 0.0
        %755 = vmatmul.mubr.f32.gmra.mxu0 %v670
        %v756 = vpop.f32.mrf.mxu0
        %v757 = vadd.f32 %v657, %v756
        %v758 = vpop.f32.mrf.mxu0
        %v759 = vadd.f32 %v657, %v758
        %760 = vdwg.mxu0
        %v761 = vmax.f32 %v739, 0.0
        %v762 = vmax.f32 %v741, 0.0
        %v763 = vmax.f32 %v745, 0.0
        %v764 = vmax.f32 %v747, 0.0
        %v765 = vmax.f32 %v751, 0.0
        %v766 = vmax.f32 %v753, 0.0
        %v767 = vmax.f32 %v757, 0.0
        %v768 = vmax.f32 %v759, 0.0
        %v769 = vld [vmem:[%s7] sm:$0x3]
        %v770 = vld [vmem:[%s8] sm:$0x3]
        %772 = vset.pattern.permute.xlu0 0
        %773 = vperm.xlu0 %772, %v770
        %v774 = vpop.permute.xlu0 %773
        %v777 = vsel %vm659, %v769, 0
        %779 = vmatprep.subr.mxu0 0.0
        %780 = vmatpush1.msra.mxu0 0.0
        %781 = vmatprep.subr.mxu0 0.0
        %782 = vmatpush1.msra.mxu0 0.0
        %783 = vmatprep.subr.mxu0 0.0
        %784 = vmatpush1.msra.mxu0 0.0
        %785 = vmatprep.subr.mxu0 0.0
        %786 = vmatpush1.msra.mxu0 0.0
        %787 = vmatprep.subr.mxu0 0.0
        %788 = vmatpush1.msra.mxu0 0.0
        %789 = vmatprep.subr.mxu0 0.0
        %790 = vmatpush1.msra.mxu0 0.0
        %791 = vmatprep.subr.mxu0 0.0
        %792 = vmatpush1.msra.mxu0 0.0
        %793 = vmatprep.subr.mxu0 0.0
        %794 = vmatpush1.msra.mxu0 0.0
        %795 = vmatprep.subr.mxu0 0.0
        %796 = vmatpush1.msra.mxu0 0.0
        %797 = vmatprep.subr.mxu0 0.0
        %798 = vmatpush1.msra.mxu0 0.0
        %799 = vmatprep.subr.mxu0 0.0
        %800 = vmatpush1.msra.mxu0 0.0
        %801 = vmatprep.subr.mxu0 0.0
        %802 = vmatpush1.msra.mxu0 0.0
        %803 = vmatprep.subr.mxu0 %v768
        %804 = vmatpush1.msra.mxu0 %v767
        %805 = vmatprep.subr.mxu0 %v766
        %806 = vmatpush1.msra.mxu0 %v765
        %807 = vmatprep.subr.mxu0 %v764
        %808 = vmatpush1.msra.mxu0 %v763
        %809 = vmatprep.subr.mxu0 %v762
        %810 = vmatpush1.msra.mxu0 %v761
        %811 = vmatprep.subr.mxu0 0.0
        %812 = vmatpush2.msra.mxu0 0.0
        %813 = vmatprep.subr.mxu0 0.0
        %814 = vmatpush2.msra.mxu0 0.0
        %815 = vmatprep.subr.mxu0 0.0
        %816 = vmatpush2.msra.mxu0 0.0
        %817 = vmatprep.subr.mxu0 0.0
        %818 = vmatpush2.msra.mxu0 0.0
        %819 = vmatprep.subr.mxu0 0.0
        %820 = vmatpush2.msra.mxu0 0.0
        %821 = vmatprep.subr.mxu0 0.0
        %822 = vmatpush2.msra.mxu0 0.0
        %823 = vmatprep.subr.mxu0 0.0
        %824 = vmatpush2.msra.mxu0 0.0
        %825 = vmatprep.subr.mxu0 0.0
        %826 = vmatpush2.msra.mxu0 0.0
        %827 = vmatprep.subr.mxu0 0.0
        %828 = vmatpush2.msra.mxu0 0.0
        %829 = vmatprep.subr.mxu0 0.0
        %830 = vmatpush2.msra.mxu0 0.0
        %831 = vmatprep.subr.mxu0 0.0
        %832 = vmatpush2.msra.mxu0 0.0
        %833 = vmatprep.subr.mxu0 0.0
        %834 = vmatpush2.msra.mxu0 0.0
        %835 = vmatprep.subr.mxu0 0.0
        %836 = vmatpush2.msra.mxu0 0.0
        %837 = vmatprep.subr.mxu0 0.0
        %838 = vmatpush2.msra.mxu0 0.0
        %839 = vmatprep.subr.mxu0 0.0
        %840 = vmatpush2.msra.mxu0 0.0
        %841 = vmatprep.subr.mxu0 0.0
        %842 = vmatpush2.msra.mxu0 0.0
        %843 = vmatprep.mubr.f32.mxu0 0.0
        %844 = vmatmul.mubr.f32.gmra.mxu0 %v777
        %v845 = vpop.f32.mrf.mxu0
        %v846 = vadd.f32 %v774, %v845
        %v847 = vpop.f32.mrf.mxu0
        %v848 = vadd.f32 %v774, %v847
        %849 = vdwg.mxu0
        %v852 = vadd.f32 %v846, %v484
        %v853 = vadd.f32 %v848, %v485
        %v856 = vcombine.low %v852, %v853
        %v858 = vunpack.c.l.s4 1983009808
        %v859 = vunpack.c.0.s8 %v858
        %v860 = vlaneseq
        %v861 = vshrl.u32 %v860, 7
        %v862 = vsub.s32 %v859, %v861
        %v863 = vrot.slane %v856, %v862
        %865 = vst [vmem:[%s340] sm:$0xf] %v863
        %s866 = sand.u32 %s230, 1
        %s867 = scalar_lea.sflag [#allocation3], %s866
        %s868 = sand.u32 %s230, 1
        %s869 = smul.addr %s868, 4
        %s870 = scalar_lea.vmem [#allocation2], %s869
        // Predicated region
        $region57: #{tpu_custom_call.1} parent=55 // pred_check
          %p871 = pneg %p240
        $region58: #{tpu_custom_call.1} parent=55 // pred_check_branch
          %873 = sbr.rel (%p871) target = $region60
        $region59: #{tpu_custom_call.1} parent=55 // pred_region
          %s875 = ssub.s32 64, 64
          %876 = vsyncadd %s867, %s875
          %s877 = smul.addr %s23, 2
          %s878 = smul.addr %s877, 32
          %s879 = scalar_lea.hbm %s9, %s878
          %s881 = sshll.u32 %s870, 4
          %s882 = int_to_ptr.vmem [resolvable:$true] %s881
          %884 = dma.vmem_to_hbm [thread:$0]  %s882, 64, %s879, %s867
        $region60: #{tpu_custom_call.1} parent=55 // pred_fallthru
          _
      $region56: #{tpu_custom_call.1} parent=5 // pred_fallthru
        _
      %p885 = scmp.le.s32.totalorder 2, %s18
      // Predicated region
      $region61: #{tpu_custom_call.1} parent=5 // pred_check
        %p886 = pneg %p885
      $region62: #{tpu_custom_call.1} parent=5 // pred_check_branch
        %888 = sbr.rel (%p886) target = $region64
      $region63: #{tpu_custom_call.1} parent=5 // pred_region
        %s889 = ssub.s32 %s18, 2
        // Predicated region
        $region65: #{tpu_custom_call.1} parent=63 // pred_check
          %p890 = pneg %p246
        $region66: #{tpu_custom_call.1} parent=63 // pred_check_branch
          %892 = sbr.rel (%p890) target = $region68
        $region67: #{tpu_custom_call.1} parent=63 // pred_region
          %s893 = sand.u32 %s231, 1
          %s894 = scalar_lea.sflag [#allocation3], %s893
          %s895 = sand.u32 %s231, 1
          %s896 = smul.addr %s895, 4
          %s897 = scalar_lea.vmem [#allocation2], %s896
          %898 = dma.done %s894, 64
        $region68: #{tpu_custom_call.1} parent=63 // pred_fallthru
          _
      $region64: #{tpu_custom_call.1} parent=5 // pred_fallthru
        _
    $region6: #{tpu_custom_call.1} parent=1 // loop_footer
      %s22 = sadd.s32 1, %s18
    $region7: #{tpu_custom_call.1} parent=1 // loop_footer_branch
      %17 = sbr.rel target = $region3
    $region8: #{tpu_custom_call.1} parent=1 // loop_exit
      _
    %899 = vsyncpa [#allocation3], 1
    %s900 = scalar_lea.sflag [#allocation3], 1
    %901 = vsyncpa %s900, 1

</llo_original>
